<compile_context>
chip_gen: v7x
topology: tpu7x:2x2x1
jax: 0.10.0
libtpu: 0.0.40
codegen_flags: <defaults>
</compile_context>

<pallas_src>
import functools

import jax
import jax.numpy as jnp
from jax.experimental import pallas as pl
from jax.experimental.pallas import tpu as pltpu


_LANE = 128


# --------------------------------------------------------------------------- #
# Generation-aware sizing helpers
# --------------------------------------------------------------------------- #
def _tpu_vmem_capacity_bytes():
    try:
        v = int(pltpu.get_tpu_info().vmem_capacity_bytes)
        if v > 0:
            return v
    except Exception:
        pass
    return 64 << 20  # conservative (v7x-sized) fallback


def _default_tile_budget_bytes(vmem_cap_bytes):
    # v5e / v6e: 128 MiB physical VMEM -> large tiles; v7x: 64 MiB -> tighter.
    return (24 << 20) if vmem_cap_bytes >= (100 << 20) else (8 << 20)


def _detect_num_cores():
    """TensorCores to split the H*W reduction across (v7x: 2/chip, v5e/v6e: 1)."""
    try:
        info = pltpu.get_tpu_info()
        for name in ("num_tensorcores", "tensorcore_count", "num_cores", "core_count"):
            v = getattr(info, name, None)
            if isinstance(v, int) and 1 <= v <= 8:
                return v
    except Exception:
        pass
    return 1  # safe default: correct everywhere, optimal on v5e/v6e


def _choose_tk(hw, c, itemsize, tile_budget_bytes):
    """Lane-aligned TK so the double-buffered (C, TK) feature tile fits the budget."""
    max_tk = max(_LANE, (tile_budget_bytes // (2 * c * itemsize)) // _LANE * _LANE)
    if hw <= max_tk:
        return hw        # one full-extent block (always a legal block shape)
    return max_tk        # cdiv grid; in-kernel mask handles the partial tail block


def _vmem_limit_bytes(c, tk, itemsize, vmem_cap_bytes):
    # double-buffered feature tile + (C,C) target/output buffers + accumulator + slack
    need = 2 * c * tk * itemsize + 3 * c * c * 4 + (2 << 20)
    cap = (64 << 20) if vmem_cap_bytes >= (100 << 20) else (40 << 20)
    return int(min(max(2 * need, 16 << 20), cap))


# --------------------------------------------------------------------------- #
# Kernels
# --------------------------------------------------------------------------- #
def _masked_bf16_block(feat_ref, start, hw):
    """Load the (C, TK) tile, zero columns past H*W, cast to bf16 MXU operands."""
    f = feat_ref[...]
    col = jax.lax.broadcasted_iota(jnp.int32, f.shape, 1) + start
    return jnp.where(col < hw, f, 0).astype(jnp.bfloat16)


def _gram_partial_kernel(feat_ref, g_ref, *, hw, tk, kpc, inv_norm):
    """g[core] = inv_norm * sum_k F_k @ F_k.T over this core's K blocks."""
    k = pl.program_id(1)

    @pl.when(k == 0)
    def _():
        g_ref[...] = jnp.zeros_like(g_ref)

    blk = pl.program_id(0) * kpc + k
    f = _masked_bf16_block(feat_ref, blk * tk, hw)
    # Contraction ((1,),(1,)): MXU-native transposed-RHS matmul, f32 accumulation.
    g_ref[0] += jax.lax.dot_general(
        f, f, (((1,), (1,)), ((), ())), preferred_element_type=jnp.float32)

    @pl.when(k == pl.num_programs(1) - 1)
    def _():
        g_ref[...] = g_ref[...] * inv_norm


def _fused_loss_kernel(feat_ref, target_ref, loss_ref, acc_ref, *, hw, tk,
                       inv_norm, scale):
    """loss = scale * sum((inv_norm * F@F.T - target)^2); the Gram never hits HBM."""
    k = pl.program_id(0)

    @pl.when(k == 0)
    def _():
        acc_ref[...] = jnp.zeros_like(acc_ref)

    f = _masked_bf16_block(feat_ref, k * tk, hw)
    acc_ref[...] += jax.lax.dot_general(
        f, f, (((1,), (1,)), ((), ())), preferred_element_type=jnp.float32)

    @pl.when(k == pl.num_programs(0) - 1)
    def _():
        diff = acc_ref[...] * inv_norm - target_ref[...]
        loss_ref[0, 0] = scale * jnp.sum(diff * diff)


# --------------------------------------------------------------------------- #
# Wrappers
# --------------------------------------------------------------------------- #
def _partial_grams(feats, *, num_cores, tile_budget_bytes, vmem_cap_bytes):
    """Returns (num_cores, C, C) per-core normalized partial Grams (sum them)."""
    c, hw = feats.shape
    itemsize = feats.dtype.itemsize
    tk = _choose_tk(hw, c, itemsize, tile_budget_bytes)
    num_k = pl.cdiv(hw, tk)
    kpc = pl.cdiv(num_k, num_cores)

    def feat_index(core, k):
        # Clamp: a core whose padded K blocks run past the array re-reads the last
        # real block; the in-kernel column mask zeroes its contribution.
        return (0, jnp.minimum(core * kpc + k, num_k - 1))

    return pl.pallas_call(
        functools.partial(_gram_partial_kernel, hw=hw, tk=tk, kpc=kpc,
                          inv_norm=1.0 / (c * hw)),
        out_shape=jax.ShapeDtypeStruct((num_cores, c, c), jnp.float32),
        grid=(num_cores, kpc),
        in_specs=[pl.BlockSpec((c, tk), feat_index)],
        out_specs=pl.BlockSpec((1, c, c), lambda core, k: (core, 0, 0)),
        compiler_params=pltpu.CompilerParams(
            dimension_semantics=("parallel", "arbitrary"),
            vmem_limit_bytes=_vmem_limit_bytes(c, tk, itemsize, vmem_cap_bytes)),
        cost_estimate=pl.CostEstimate(
            flops=2 * c * c * hw,
            transcendentals=0,
            bytes_accessed=c * hw * itemsize + num_cores * c * c * 4),
    )(feats)


def gram_matrix(x, *, num_cores=None, tile_budget_bytes=None):
    """Mirror of the PyTorch gram_matrix (batch must be 1)."""
    b, c, h, w = x.shape
    assert b == 1, "torch's input.view(c, h*w) implies batch size 1"
    vmem_cap = _tpu_vmem_capacity_bytes()
    if num_cores is None:
        num_cores = _detect_num_cores()
    if tile_budget_bytes is None:
        tile_budget_bytes = _default_tile_budget_bytes(vmem_cap)
    feats = x.reshape(c, h * w)
    partials = _partial_grams(feats, num_cores=num_cores,
                              tile_budget_bytes=tile_budget_bytes,
                              vmem_cap_bytes=vmem_cap)
    return partials.sum(axis=0)  # per-core partials are already normalized


class StyleLoss:
    """JAX/Pallas port of the PyTorch StyleLoss module (forward is pass-through)."""

    def __init__(self, target_feature, weight=1.0, *, num_cores=None,
                 tile_budget_bytes=None):
        self._vmem_cap = _tpu_vmem_capacity_bytes()
        self._num_cores = _detect_num_cores() if num_cores is None else int(num_cores)
        self._tile_budget = (_default_tile_budget_bytes(self._vmem_cap)
                             if tile_budget_bytes is None else int(tile_budget_bytes))
        self.target = gram_matrix(target_feature, num_cores=self._num_cores,
                                  tile_budget_bytes=self._tile_budget)
        self.weight = float(weight)
        self.loss = jnp.float32(0.0)

    def __call__(self, x):
        b, c, h, w = x.shape
        assert b == 1
        hw = h * w
        feats = x.reshape(c, hw)
        if self._num_cores == 1:
            self.loss = self._fused_loss(feats, c, hw)
        else:
            # v7x path: K reduction split across TensorCores (parallel axis), then a
            # tiny XLA epilogue (sum of partials, diff^2) — O(C^2), a few microseconds.
            g = _partial_grams(feats, num_cores=self._num_cores,
                               tile_budget_bytes=self._tile_budget,
                               vmem_cap_bytes=self._vmem_cap).sum(axis=0)
            diff = g - self.target
            self.loss = (self.weight / (c * c)) * jnp.sum(diff * diff)
        return x  # forward returns its input unchanged (pass-through)

    def _fused_loss(self, feats, c, hw):
        itemsize = feats.dtype.itemsize
        tk = _choose_tk(hw, c, itemsize, self._tile_budget)
        num_k = pl.cdiv(hw, tk)
        loss = pl.pallas_call(
            functools.partial(_fused_loss_kernel, hw=hw, tk=tk,
                              inv_norm=1.0 / (c * hw),
                              scale=self.weight / (c * c)),
            out_shape=jax.ShapeDtypeStruct((1, 1), jnp.float32),
            grid=(num_k,),
            in_specs=[
                pl.BlockSpec((c, tk), lambda k: (0, k)),
                # TODO(synk): pipeline_mode=pl.Buffered(1) would single-buffer this
                # resident target block and save C^2*4 bytes of VMEM.
                pl.BlockSpec((c, c), lambda k: (0, 0)),
            ],
            out_specs=pl.BlockSpec(memory_space=pltpu.MemorySpace.SMEM),
            scratch_shapes=[pltpu.VMEM((c, c), jnp.float32)],
            compiler_params=pltpu.CompilerParams(
                dimension_semantics=("arbitrary",),
                vmem_limit_bytes=_vmem_limit_bytes(c, tk, itemsize, self._vmem_cap)),
            cost_estimate=pl.CostEstimate(
                flops=2 * c * c * hw,
                transcendentals=0,
                bytes_accessed=c * hw * itemsize + c * c * 4 + 4),
        )(feats, self.target)
        return loss[0, 0]


# --------------------------------------------------------------------------- #
# Pure-JAX reference (bf16-operand / f32-accum matched) and self-test
# --------------------------------------------------------------------------- #
def _reference_gram(x):
    b, c, h, w = x.shape
    f = x.reshape(c, h * w).astype(jnp.bfloat16).astype(jnp.float32)
    return (f @ f.T) / (c * h * w)


if __name__ == "__main__":
    key = jax.random.PRNGKey(0)
    k_t, k_x = jax.random.split(key)

    # B=1 (required by the module), C=8, 14x14 -> H*W=196 (non-128-multiple: the
    # masked-tail / cdiv grid path is exercised). bf16 features = the fast path.
    shape = (1, 8, 14, 14)
    target_feature = jax.random.normal(k_t, shape, dtype=jnp.float32).astype(jnp.bfloat16)
    x = jax.random.normal(k_x, shape, dtype=jnp.float32).astype(jnp.bfloat16)

    ref_gram_x = _reference_gram(x)
    ref_gram_t = _reference_gram(target_feature)
    ref_loss = jnp.mean((ref_gram_x - ref_gram_t) ** 2)

    # 1) gram_matrix, single-core, auto (generation-aware) tile budget.
    g1 = jax.block_until_ready(gram_matrix(x, num_cores=1))
    assert jnp.allclose(g1, ref_gram_x, rtol=1e-3, atol=1e-5), "gram single-core"

    # 2) gram_matrix, dual-core K-split with a tiny tile budget so TK=128 and the
    #    grid has a masked partial tail block.
    g2 = jax.block_until_ready(gram_matrix(x, num_cores=2, tile_budget_bytes=4096))
    assert jnp.allclose(g2, ref_gram_x, rtol=1e-3, atol=1e-5), "gram dual-core"

    # 3) StyleLoss, fused single-core path (SMEM scalar loss), masked-tail grid of 2.
    m1 = StyleLoss(target_feature, weight=1.0, num_cores=1, tile_budget_bytes=4096)
    out1 = jax.block_until_ready(m1(x))
    loss1 = jax.block_until_ready(m1.loss)
    assert out1 is x
    assert jnp.allclose(loss1, ref_loss, rtol=5e-3, atol=1e-6), (loss1, ref_loss)

    # 4) StyleLoss, dual-core (v7x-style) partial-Gram path, auto budget.
    m2 = StyleLoss(target_feature, weight=1.0, num_cores=2)
    jax.block_until_ready(m2(x))
    loss2 = jax.block_until_ready(m2.loss)
    assert jnp.allclose(loss2, ref_loss, rtol=5e-3, atol=1e-6), (loss2, ref_loss)

    # 5) f32 inputs exercise the in-kernel bf16-cast fallback and auto core detection.
    m3 = StyleLoss(target_feature.astype(jnp.float32), weight=0.5)
    jax.block_until_ready(m3(x.astype(jnp.float32)))
    loss3 = jax.block_until_ready(m3.loss)
    assert jnp.allclose(loss3, 0.5 * ref_loss, rtol=5e-3, atol=1e-6), (loss3, ref_loss)

    print("KERNEL_OK")
</pallas_src>

<mosaic_0001>
module attributes {stable_mosaic.version = 11 : i64} {
  func.func @_gram_partial_kernel(%arg0: i32, %arg1: i32, %arg2: memref<8x196xbf16, #tpu.memory_space<vmem>>, %arg3: memref<1x8x8xf32, #tpu.memory_space<vmem>>) attributes {dimension_semantics = [#tpu.dimension_semantics<parallel>, #tpu.dimension_semantics<arbitrary>], iteration_bounds = array<i64: 1, 1>, scalar_prefetch = 0 : i64, scratch_operands = 0 : i64, tpu.core_type = #tpu.core_type<tc>, window_params = [{transform_indices = @transform_0, window_bounds = array<i64: 8, 196>}, {transform_indices = @transform_1, window_bounds = array<i64: 1, 8, 8>}]} {
    %c0_i32 = arith.constant 0 : i32
    %0 = arith.cmpi eq, %arg1, %c0_i32 : i32
    %1 = arith.extui %0 : i1 to i32
    %c0_i32_0 = arith.constant 0 : i32
    %2 = arith.cmpi ne, %1, %c0_i32_0 : i32
    scf.if %2 {
      %cst_12 = arith.constant 0.000000e+00 : f32
      %25 = vector.broadcast %cst_12 : f32 to vector<1x8x8xf32>
      %c0_13 = arith.constant 0 : index
      %c0_14 = arith.constant 0 : index
      %c0_15 = arith.constant 0 : index
      %26 = vector.load %arg3[%c0_13, %c0_14, %c0_15] : memref<1x8x8xf32, #tpu.memory_space<vmem>>, vector<1x8x8xf32>
      tpu.vector_store %arg3[%c0_13, %c0_14, %c0_15], %25 {strides = array<i32>} : memref<1x8x8xf32, #tpu.memory_space<vmem>>, vector<1x8x8xf32>,
    } else {
    }
    %c1_i32 = arith.constant 1 : i32
    %3 = arith.muli %arg0, %c1_i32 : i32
    %4 = arith.addi %3, %arg1 : i32
    %c196_i32 = arith.constant 196 : i32
    %5 = arith.muli %4, %c196_i32 : i32
    %c0 = arith.constant 0 : index
    %c0_1 = arith.constant 0 : index
    %6 = vector.load %arg2[%c0, %c0_1] : memref<8x196xbf16, #tpu.memory_space<vmem>>, vector<8x196xbf16>
    %7 = tpu.iota {dimensions = array<i32: 1>} : vector<8x196xi32>
    %8 = vector.broadcast %5 : i32 to vector<8x196xi32>
    %9 = arith.addi %7, %8 : vector<8x196xi32>
    %c196_i32_2 = arith.constant 196 : i32
    %10 = vector.broadcast %c196_i32_2 : i32 to vector<8x196xi32>
    %11 = arith.cmpi slt, %9, %10 : vector<8x196xi32>
    %c0_i32_3 = arith.constant 0 : i32
    %12 = arith.sitofp %c0_i32_3 : i32 to bf16
    %13 = vector.broadcast %12 : bf16 to vector<8x196xbf16>
    %14 = arith.select %11, %6, %13 : vector<8x196xi1>, vector<8x196xbf16>
    %c0_4 = arith.constant 0 : index
    %c0_5 = arith.constant 0 : index
    %c0_6 = arith.constant 0 : index
    %15 = vector.load %arg3[%c0_4, %c0_5, %c0_6] : memref<1x8x8xf32, #tpu.memory_space<vmem>>, vector<1x8x8xf32>
    %16 = vector.shape_cast %15 : vector<1x8x8xf32> to vector<8x8xf32>
    %cst = arith.constant dense<0.000000e+00> : vector<8x8xf32>
    %17 = tpu.matmul %14, %14, %cst {dimension_numbers = #tpu.dot_dimension_numbers<[1], [1], [0], [0], [0, 0, 1, 0], [], []>} : vector<8x196xbf16>, vector<8x196xbf16>, vector<8x8xf32> -> vector<8x8xf32>
    %18 = arith.addf %16, %17 : vector<8x8xf32>
    %c0_7 = arith.constant 0 : index
    %c0_8 = arith.constant 0 : index
    %c0_9 = arith.constant 0 : index
    %19 = vector.load %arg3[%c0_7, %c0_8, %c0_9] : memref<1x8x8xf32, #tpu.memory_space<vmem>>, vector<1x8x8xf32>
    %20 = vector.shape_cast %19 : vector<1x8x8xf32> to vector<8x8xf32>
    %21 = vector.shape_cast %18 : vector<8x8xf32> to vector<1x8x8xf32>
    tpu.vector_store %arg3[%c0_7, %c0_8, %c0_9], %21 {strides = array<i32>} : memref<1x8x8xf32, #tpu.memory_space<vmem>>, vector<1x8x8xf32>,
    %c0_i32_10 = arith.constant 0 : i32
    %22 = arith.cmpi eq, %arg1, %c0_i32_10 : i32
    %23 = arith.extui %22 : i1 to i32
    %c0_i32_11 = arith.constant 0 : i32
    %24 = arith.cmpi ne, %23, %c0_i32_11 : i32
    scf.if %24 {
      %c0_12 = arith.constant 0 : index
      %c0_13 = arith.constant 0 : index
      %c0_14 = arith.constant 0 : index
      %25 = vector.load %arg3[%c0_12, %c0_13, %c0_14] : memref<1x8x8xf32, #tpu.memory_space<vmem>>, vector<1x8x8xf32>
      %cst_15 = arith.constant 6.37755089E-4 : f32
      %26 = vector.broadcast %cst_15 : f32 to vector<1x8x8xf32>
      %27 = arith.mulf %25, %26 : vector<1x8x8xf32>
      %c0_16 = arith.constant 0 : index
      %c0_17 = arith.constant 0 : index
      %c0_18 = arith.constant 0 : index
      %28 = vector.load %arg3[%c0_16, %c0_17, %c0_18] : memref<1x8x8xf32, #tpu.memory_space<vmem>>, vector<1x8x8xf32>
      tpu.vector_store %arg3[%c0_16, %c0_17, %c0_18], %27 {strides = array<i32>} : memref<1x8x8xf32, #tpu.memory_space<vmem>>, vector<1x8x8xf32>,
    } else {
    }
    return
  }
  func.func @transform_0(%arg0: i32, %arg1: i32) -> (i32, i32) {
    %c1_i32 = arith.constant 1 : i32
    %0 = arith.muli %arg0, %c1_i32 : i32
    %1 = arith.addi %0, %arg1 : i32
    %c0_i32 = arith.constant 0 : i32
    %2 = arith.minsi %1, %c0_i32 : i32
    %c0_i32_0 = arith.constant 0 : i32
    %c0_i32_1 = arith.constant 0 : i32
    return %c0_i32_0, %2 : i32, i32
  }
  func.func @transform_1(%arg0: i32, %arg1: i32) -> (i32, i32, i32) {
    %c0_i32 = arith.constant 0 : i32
    %c0_i32_0 = arith.constant 0 : i32
    %c0_i32_1 = arith.constant 0 : i32
    return %arg0, %c0_i32, %c0_i32_0 : i32, i32, i32
  }
}

</mosaic_0001>

<llo_original>
// kernel: tpu_custom_call.1
$region0: #{tpu_custom_call.1}
  #allocation0 [shape = 'u32[]', space=smem, size = 0x4, offset = 0x4, fixed_abs, tag = 'smem constant byte address 0x4 - core index']
  #allocation1 [shape = 'u32[144,128]{1,0:T(1,128)}', space=vmem, size = 0x12000, scoped, tag = 'internal scratch']
  %s0 = inlined_call_operand.hbm [shape: bf16[8,196], index: 0, kind: input, shape index: {}]
  %s1 = inlined_call_operand.hbm [shape: f32[1,8,8], index: 1, kind: output, shape index: {}]
  %s2 = sld [smem:[#allocation0]]
  $region26: #{tpu_custom_call.1} parent=0
    _
  %s4 = ssub.s32 1, %s2
  %s5 = scalar_select 0, %s4, %s2
  $region1: #{tpu_custom_call.1} parent=0
    #allocation2 [shape = 'u8[4096]{0}', space=vmem, size = 0x1000, scoped, tag = 'input window, operand 0, single buffered']
    #allocation3 [shape = 's32[1]{0}', space=sflag, size = 0x4, scoped, tag = 'scoped memory for tpu_custom_call.1']
    #allocation4 [shape = 's32[1]{0}', space=sflag, size = 0x4, scoped, tag = 'scoped memory for tpu_custom_call.1']
    #allocation5 [shape = 'u8[4096]{0}', space=vmem, size = 0x1000, scoped, tag = 'output window, operand 0, single buffered']
    %6 = vsyncpa [#allocation3], 0
    %7 = vsyncpa [#allocation4], 0
    // Predicated region
    $region2: #{tpu_custom_call.1} parent=1 // pred_check
      _
    $region3: #{tpu_custom_call.1} parent=1 // pred_check_branch
      %9 = sbr.rel (0) target = $region5
    $region4: #{tpu_custom_call.1} parent=1 // pred_region
      %s10 = sadd.s32 0, 0
      %p11 = scmp.lt.s32.totalorder %s10, 0
      %s12 = scalar_select %p11, %s10, 0
      %s13 = smul.u32 2, %s12
      %s15 = ssub.s32 128, 128
      %16 = vsyncadd [#allocation3], %s15
      %s17 = smul.addr %s13, 64
      %s18 = scalar_lea.hbm %s0, %s17
      %s20 = sshll.u32 [#allocation2], 4
      %s21 = int_to_ptr.vmem [resolvable:$true] %s20
      %23 = dma.hbm_to_vmem [thread:$0]  %s18, 128, %s21, [#allocation3]
    $region5: #{tpu_custom_call.1} parent=1 // pred_fallthru
      _
    // Predicated region
    $region6: #{tpu_custom_call.1} parent=1 // pred_check
      _
    $region7: #{tpu_custom_call.1} parent=1 // pred_check_branch
      %25 = sbr.rel (0) target = $region9
    $region8: #{tpu_custom_call.1} parent=1 // pred_region
      %26 = dma.done [#allocation3], 128
    $region9: #{tpu_custom_call.1} parent=1 // pred_fallthru
      _
    %s27 = sadd.s32 0, 0
    %p28 = scmp.lt.s32.totalorder %s27, 0
    %s29 = scalar_select %p28, %s27, 0
    %s30 = smul.u32 2, %s29
    %p32 = scmp.eq.s32.totalorder 0, 0
    // Predicated region
    $region10: #{tpu_custom_call.1} parent=1 // pred_check
      %p33 = pneg %p32
    $region11: #{tpu_custom_call.1} parent=1 // pred_check_branch
      %35 = sbr.rel (%p33) target = $region13
    $region12: #{tpu_custom_call.1} parent=1 // pred_region
      %vm36 = vcmask 64512
      %37 = vst.msk [vmem:[#allocation5] sm:$0xff] %vm36, 0.0
    $region13: #{tpu_custom_call.1} parent=1 // pred_fallthru
      _
    %s38 = sadd.s32 0, 0
    %s39 = smul.u32 %s38, 196
    %v40 = vld [vmem:[#allocation2] sm:$0xff]
    %v41 = vlaneseq
    %v42 = vand.u32 %v41, 127
    %v43 = vadd.s32 %v42, 128
    %v44 = vstv %s39
    %v45 = vadd.s32 %v42, %v44
    %v46 = vadd.s32 %v43, %v44
    %vm47 = vcmp.lt.s32.totalorder %v45, 196
    %vm48 = vcmp.lt.s32.totalorder %v46, 196
    %vm49 = vmpackc.low %vm48, %vm47
    %v50 = vsel %vm49, %v40, 0
    %v51 = vld [vmem:[#allocation5] sm:$0xff]
    %v53 = vunpack.c.l.b16 %v50
    %v54 = vunpack.c.h.b16 %v50
    %v55 = vpack.c.b16 %v53, %v53
    %v56 = vpack.c.b16 %v54, %v54
    %vm58 = vcmask 556032
    %v60 = vsel %vm58, %v56, 0
    %62 = vmatprep.subr.bf16.mxu0 %v60
    %63 = vmatpush1.bf16.xpose.msra.mxu0 %v55
    %64 = vmatprep.subr.bf16.mxu0 0
    %65 = vmatpush1.bf16.xpose.msra.mxu0 0
    %66 = vmatprep.subr.bf16.mxu0 0
    %67 = vmatpush1.bf16.xpose.msra.mxu0 0
    %68 = vmatprep.subr.bf16.mxu0 0
    %69 = vmatpush1.bf16.xpose.msra.mxu0 0
    %70 = vmatprep.subr.bf16.mxu0 0
    %71 = vmatpush1.bf16.xpose.msra.mxu0 0
    %72 = vmatprep.subr.bf16.mxu0 0
    %73 = vmatpush1.bf16.xpose.msra.mxu0 0
    %74 = vmatprep.subr.bf16.mxu0 0
    %75 = vmatpush1.bf16.xpose.msra.mxu0 0
    %76 = vmatprep.subr.bf16.mxu0 0
    %77 = vmatpush1.bf16.xpose.msra.mxu0 0
    %78 = vmatprep.subr.bf16.mxu0 0
    %79 = vmatpush1.bf16.xpose.msra.mxu0 0
    %80 = vmatprep.subr.bf16.mxu0 0
    %81 = vmatpush1.bf16.xpose.msra.mxu0 0
    %82 = vmatprep.subr.bf16.mxu0 0
    %83 = vmatpush1.bf16.xpose.msra.mxu0 0
    %84 = vmatprep.subr.bf16.mxu0 0
    %85 = vmatpush1.bf16.xpose.msra.mxu0 0
    %86 = vmatprep.subr.bf16.mxu0 0
    %87 = vmatpush1.bf16.xpose.msra.mxu0 0
    %88 = vmatprep.subr.bf16.mxu0 0
    %89 = vmatpush1.bf16.xpose.msra.mxu0 0
    %90 = vmatprep.subr.bf16.mxu0 0
    %91 = vmatpush1.bf16.xpose.msra.mxu0 0
    %92 = vmatprep.subr.bf16.mxu0 0
    %93 = vmatpush1.bf16.xpose.msra.mxu0 0
    %94 = vmatprep.mubr.bf16.mxu0 %v60
    %95 = vmatmul.mubr.bf16.gmra.mrb[0].mxu0 %v55
    %v96 = vpop.f32.mrb[0].mxu0
    %v97 = vadd.f32 0.0, %v96
    %v98 = vpop.f32.mrb[0].mxu0
    %v99 = vpop.f32.mrb[0].mxu0
    %v100 = vpop.f32.mrb[0].mxu0
    %101 = vdwg.mxu0
    %v102 = vadd.f32 %v51, %v97
    %vm103 = vcmask 64512
    %104 = vst.msk [vmem:[#allocation5] sm:$0xff] %vm103, %v102
    // Predicated region
    $region14: #{tpu_custom_call.1} parent=1 // pred_check
      %p105 = pneg %p32
    $region15: #{tpu_custom_call.1} parent=1 // pred_check_branch
      %107 = sbr.rel (%p105) target = $region17
    $region16: #{tpu_custom_call.1} parent=1 // pred_region
      %v108 = vld [vmem:[#allocation5] sm:$0xff]
      %v109 = vmul.f32 %v108, 0.0006377551
      %110 = vst.msk [vmem:[#allocation5] sm:$0xff] %vm103, %v109
    $region17: #{tpu_custom_call.1} parent=1 // pred_fallthru
      _
    // Predicated region
    $region18: #{tpu_custom_call.1} parent=1 // pred_check
      _
    $region19: #{tpu_custom_call.1} parent=1 // pred_check_branch
      %112 = sbr.rel (0) target = $region21
    $region20: #{tpu_custom_call.1} parent=1 // pred_region
      %s114 = ssub.s32 128, 128
      %115 = vsyncadd [#allocation4], %s114
      %s117 = sshll.u32 [#allocation5], 4
      %s118 = int_to_ptr.vmem [resolvable:$true] %s117
      %120 = dma.vmem_to_hbm [thread:$0]  %s118, 128, %s1, [#allocation4]
    $region21: #{tpu_custom_call.1} parent=1 // pred_fallthru
      _
    // Predicated region
    $region22: #{tpu_custom_call.1} parent=1 // pred_check
      _
    $region23: #{tpu_custom_call.1} parent=1 // pred_check_branch
      %122 = sbr.rel (0) target = $region25
    $region24: #{tpu_custom_call.1} parent=1 // pred_region
      %123 = dma.done [#allocation4], 128
    $region25: #{tpu_custom_call.1} parent=1 // pred_fallthru
      _
    %124 = vsyncpa [#allocation3], 1
    %125 = vsyncpa [#allocation4], 1

</llo_original>
